<compile_context>
chip_gen: v7x
topology: tpu7x:2x2x1
jax: 0.10.0
libtpu: 0.0.40
codegen_flags: <defaults>
</compile_context>

<pallas_src>
from functools import partial

import jax
import jax.numpy as jnp
from jax.experimental import pallas as pl
from jax.experimental.pallas import tpu as pltpu


def _make_scaled_sigmoid_kernel(min_val: float, max_val: float):
    scale = max_val - min_val

    def kernel(p_ref, o_ref):
        # One vreg-ish of work: EUP exp (sigmoid) + 2 VPU ops (scale, shift).
        o_ref[...] = min_val + scale * jax.nn.sigmoid(p_ref[...])

    return kernel


def _scaled_sigmoid_pallas(param: jax.Array,
                           min_val: float,
                           max_val: float) -> jax.Array:
    """Forward pass via a gridless, single-block Pallas call."""
    orig_shape = param.shape
    # Lane-dense layout: flatten so the (long) axis is the last/lane axis.
    flat = param.reshape(1, -1)
    n = flat.shape[1]

    kernel = _make_scaled_sigmoid_kernel(min_val, max_val)
    out = pl.pallas_call(
        kernel,
        out_shape=jax.ShapeDtypeStruct((1, n), param.dtype),
        # No grid, no index_maps: single whole-array block resident in VMEM.
        in_specs=[pl.BlockSpec(memory_space=pltpu.MemorySpace.VMEM)],
        out_specs=pl.BlockSpec(memory_space=pltpu.MemorySpace.VMEM),
        # Tell XLA this custom call is near-free.
        cost_estimate=pl.CostEstimate(
            flops=5 * n,
            transcendentals=n,
            bytes_accessed=2 * n * param.dtype.itemsize,
        ),
    )(flat)
    return out.reshape(orig_shape)


# --- differentiable wrapper (param is a learnable nn.Parameter in PyTorch) ---

@partial(jax.custom_vjp, nondiff_argnums=(1, 2))
def _scaled_sigmoid(param, min_val, max_val):
    return _scaled_sigmoid_pallas(param, min_val, max_val)


def _scaled_sigmoid_fwd(param, min_val, max_val):
    return _scaled_sigmoid_pallas(param, min_val, max_val), param


def _scaled_sigmoid_bwd(min_val, max_val, param, g):
    sig = jax.nn.sigmoid(param)
    return (g * (max_val - min_val) * sig * (1.0 - sig),)


_scaled_sigmoid.defvjp(_scaled_sigmoid_fwd, _scaled_sigmoid_bwd)


def scaled_sigmoid_parameter(param: jax.Array,
                             min_val: float = -0.01,
                             max_val: float = 0.01) -> jax.Array:
    """Pallas equivalent of ScaledSigmoidParameter.forward()."""
    return _scaled_sigmoid(param, float(min_val), float(max_val))


if __name__ == "__main__":
    key = jax.random.PRNGKey(0)
    shape = (81, 2)
    min_val, max_val = -0.01, 0.01

    # Case 1: zeros (exactly matches nn.Parameter(torch.zeros(shape))).
    param_zeros = jnp.zeros(shape, dtype=jnp.float32)
    out_zeros = jax.block_until_ready(
        scaled_sigmoid_parameter(param_zeros, min_val, max_val))

    # Case 2: small random param, checked against a pure-JAX reference.
    param_rand = jax.random.normal(key, shape, dtype=jnp.float32)
    out_rand = jax.block_until_ready(
        scaled_sigmoid_parameter(param_rand, min_val, max_val))

    ref_zeros = min_val + (max_val - min_val) * jax.nn.sigmoid(param_zeros)
    ref_rand = min_val + (max_val - min_val) * jax.nn.sigmoid(param_rand)

    assert out_zeros.shape == shape and out_zeros.dtype == jnp.float32
    assert jnp.allclose(out_zeros, ref_zeros, atol=1e-7), "zeros case mismatch"
    assert jnp.allclose(out_rand, ref_rand, atol=1e-7), "random case mismatch"
    # sigmoid(0) = 0.5 -> midpoint of [min_val, max_val] = 0.0
    assert jnp.allclose(out_zeros, 0.0, atol=1e-7)

    # Gradient check (parameter is learnable in the PyTorch module).
    def loss(p):
        return jnp.sum(scaled_sigmoid_parameter(p, min_val, max_val))

    grad = jax.block_until_ready(jax.grad(loss)(param_rand))
    sig = jax.nn.sigmoid(param_rand)
    ref_grad = (max_val - min_val) * sig * (1.0 - sig)
    assert jnp.allclose(grad, ref_grad, atol=1e-7), "gradient mismatch"

    print("KERNEL_OK")
</pallas_src>

<mosaic_0001>
module attributes {stable_mosaic.version = 11 : i64} {
  func.func @kernel(%arg0: memref<1x162xf32, #tpu.memory_space<vmem>>, %arg1: memref<1x162xf32, #tpu.memory_space<vmem>>) attributes {dimension_semantics = [], scalar_prefetch = 0 : i64, scratch_operands = 0 : i64, tpu.core_type = #tpu.core_type<tc>} {
    %c0 = arith.constant 0 : index
    %c0_0 = arith.constant 0 : index
    %0 = vector.load %arg0[%c0, %c0_0] : memref<1x162xf32, #tpu.memory_space<vmem>>, vector<1x162xf32>
    %1 = arith.negf %0 : vector<1x162xf32>
    %2 = math.exp %1 : vector<1x162xf32>
    %cst = arith.constant 1.000000e+00 : f32
    %3 = vector.broadcast %cst : f32 to vector<1x162xf32>
    %4 = arith.addf %3, %2 : vector<1x162xf32>
    %5 = arith.divf %3, %4 : vector<1x162xf32>
    %cst_1 = arith.constant 2.000000e-02 : f32
    %6 = vector.broadcast %cst_1 : f32 to vector<1x162xf32>
    %7 = arith.mulf %6, %5 : vector<1x162xf32>
    %cst_2 = arith.constant -0.00999999977 : f32
    %8 = vector.broadcast %cst_2 : f32 to vector<1x162xf32>
    %9 = arith.addf %8, %7 : vector<1x162xf32>
    %c0_3 = arith.constant 0 : index
    %c0_4 = arith.constant 0 : index
    %10 = vector.load %arg1[%c0_3, %c0_4] : memref<1x162xf32, #tpu.memory_space<vmem>>, vector<1x162xf32>
    tpu.vector_store %arg1[%c0_3, %c0_4], %9 {strides = array<i32>} : memref<1x162xf32, #tpu.memory_space<vmem>>, vector<1x162xf32>,
    return
  }
}

</mosaic_0001>

<llo_original>
// kernel: tpu_custom_call.1
$region0: #{tpu_custom_call.1}
  #allocation0 [shape = 'u32[]', space=smem, size = 0x4, offset = 0x4, fixed_abs, tag = 'smem constant byte address 0x4 - core index']
  #allocation1 [shape = 'u32[144,128]{1,0:T(1,128)}', space=vmem, size = 0x12000, scoped, tag = 'internal scratch']
  %s0 = inlined_call_operand.hbm [shape: f32[1,162], index: 0, kind: input, shape index: {}]
  %s1 = inlined_call_operand.hbm [shape: f32[1,162], index: 1, kind: output, shape index: {}]
  %s2 = sld [smem:[#allocation0]]
  $region18: #{tpu_custom_call.1} parent=0
    _
  %s4 = ssub.s32 1, %s2
  %s5 = scalar_select 0, %s4, %s2
  $region1: #{tpu_custom_call.1} parent=0
    #allocation2 [shape = 'u8[1024]{0}', space=vmem, size = 0x400, scoped, tag = 'input window, operand 0, single buffered']
    #allocation3 [shape = 's32[1]{0}', space=sflag, size = 0x4, scoped, tag = 'scoped memory for tpu_custom_call.1']
    #allocation4 [shape = 's32[1]{0}', space=sflag, size = 0x4, scoped, tag = 'scoped memory for tpu_custom_call.1']
    #allocation5 [shape = 'u8[1024]{0}', space=vmem, size = 0x400, scoped, tag = 'output window, operand 0, single buffered']
    %6 = vsyncpa [#allocation3], 0
    %7 = vsyncpa [#allocation4], 0
    // Predicated region
    $region2: #{tpu_custom_call.1} parent=1 // pred_check
      _
    $region3: #{tpu_custom_call.1} parent=1 // pred_check_branch
      %9 = sbr.rel (0) target = $region5
    $region4: #{tpu_custom_call.1} parent=1 // pred_region
      %s11 = ssub.s32 32, 32
      %12 = vsyncadd [#allocation3], %s11
      %s14 = sshll.u32 [#allocation2], 4
      %s15 = int_to_ptr.vmem [resolvable:$true] %s14
      %17 = dma.hbm_to_vmem [thread:$0]  %s0, 32, %s15, [#allocation3]
    $region5: #{tpu_custom_call.1} parent=1 // pred_fallthru
      _
    // Predicated region
    $region6: #{tpu_custom_call.1} parent=1 // pred_check
      _
    $region7: #{tpu_custom_call.1} parent=1 // pred_check_branch
      %19 = sbr.rel (0) target = $region9
    $region8: #{tpu_custom_call.1} parent=1 // pred_region
      %20 = dma.done [#allocation3], 32
    $region9: #{tpu_custom_call.1} parent=1 // pred_fallthru
      _
    %v21 = vld [vmem:[#allocation2] sm:$0x3]
    %v22 = vxor.u32 %v21, 2147483648
    %v23 = vmul.f32 %v22, 1.442695
    %v24 = vpow.pop %v23
    %v25 = vadd.f32 %v24, 1.0
    %v26 = vrcp.pop %v25
    %v27 = vmul.f32 1.0, %v26
    %v28 = vmul.f32 %v27, 0.02
    %v29 = vadd.f32 %v28, -0.01
    %v30 = vlaneseq
    %vm31 = vcmp.ge.s32.totalorder %v30, 0
    %vm32 = vcmp.lt.s32.totalorder %v30, 162
    %vm33 = vmand %vm31, %vm32
    %34 = vst.msk [vmem:[#allocation5] sm:$0x3] %vm33, %v29
    // Predicated region
    $region10: #{tpu_custom_call.1} parent=1 // pred_check
      _
    $region11: #{tpu_custom_call.1} parent=1 // pred_check_branch
      %36 = sbr.rel (0) target = $region13
    $region12: #{tpu_custom_call.1} parent=1 // pred_region
      %s38 = ssub.s32 32, 32
      %39 = vsyncadd [#allocation4], %s38
      %s41 = sshll.u32 [#allocation5], 4
      %s42 = int_to_ptr.vmem [resolvable:$true] %s41
      %44 = dma.vmem_to_hbm [thread:$0]  %s42, 32, %s1, [#allocation4]
    $region13: #{tpu_custom_call.1} parent=1 // pred_fallthru
      _
    // Predicated region
    $region14: #{tpu_custom_call.1} parent=1 // pred_check
      _
    $region15: #{tpu_custom_call.1} parent=1 // pred_check_branch
      %46 = sbr.rel (0) target = $region17
    $region16: #{tpu_custom_call.1} parent=1 // pred_region
      %47 = dma.done [#allocation4], 32
    $region17: #{tpu_custom_call.1} parent=1 // pred_fallthru
      _
    %48 = vsyncpa [#allocation3], 1
    %49 = vsyncpa [#allocation4], 1

</llo_original>
